<compile_context>
chip_gen: v5e
topology: v5e:2x2
jax: 0.10.0
libtpu: 0.0.40
codegen_flags: <defaults>
</compile_context>

<pallas_src>
import jax
import jax.numpy as jnp
from jax.experimental import pallas as pl
from jax.experimental.pallas import tpu as pltpu

_LANE = 128                      # TPU vreg lane width (last-dim tile)
_TARGET_BLOCK_BYTES = 2 << 20    # ~2 MiB per block; 4 * 2 MiB double-buffered
                                 # in+out = 8 MiB < 16 MiB default scoped VMEM (v5e)


def _sublane_multiple(dtype):
    """Sublane packing multiple: 8 for 4-byte, 16 for 2-byte, 32 for 1-byte dtypes."""
    itemsize = jnp.dtype(dtype).itemsize
    return max(8, 32 // max(itemsize, 1))


def _identity_kernel(x_ref, o_ref):
    # Straight VMEM copy of the current block.
    o_ref[...] = x_ref[...]


def _copy_2d(x2d):
    """Lane-dense tiled copy of a (rows, cols) array (cols is always 128 here)."""
    rows, cols = x2d.shape
    itemsize = jnp.dtype(x2d.dtype).itemsize
    sub = _sublane_multiple(x2d.dtype)

    # Rows per block from a byte budget, rounded down to the sublane multiple.
    tm_budget = (_TARGET_BLOCK_BYTES // (cols * itemsize)) // sub * sub
    tm_budget = max(sub, tm_budget)

    if rows <= tm_budget:
        # Single full-extent block (full array dims are always a legal block shape).
        tm = rows
        grid = (1,)
    else:
        # Tiled copy; the ragged last block is handled by Pallas OOB read/write
        # masking, so no host-side padding of the row dimension is required.
        tm = tm_budget
        grid = (pl.cdiv(rows, tm),)

    return pl.pallas_call(
        _identity_kernel,
        out_shape=jax.ShapeDtypeStruct((rows, cols), x2d.dtype),
        grid=grid,
        in_specs=[pl.BlockSpec((tm, cols), lambda i: (i, 0))],
        out_specs=pl.BlockSpec((tm, cols), lambda i: (i, 0)),
        input_output_aliases={0: 0},
        compiler_params=pltpu.CompilerParams(
            dimension_semantics=("parallel",),
        ),
        cost_estimate=pl.CostEstimate(
            flops=0,
            transcendentals=0,
            bytes_accessed=2 * rows * cols * itemsize,
        ),
    )(x2d)


def identity_forward(x, materialize=False):
    """Equivalent of TinyHAR `Identity`.

    Default (materialize=False): returns x unchanged — zero FLOPs, zero HBM
    traffic, no kernel launch (the only change that makes an identity free).

    materialize=True: routes x through a lane-dense Pallas copy kernel so the
    TPU data path is exercised.
    """
    if not materialize:
        return x

    orig_shape = x.shape
    n = x.size
    if n == 0:
        return x

    if n % _LANE == 0:
        # Lane-dense view: every load/store uses all 128 lanes.
        out2d = _copy_2d(x.reshape(n // _LANE, _LANE))
        return out2d.reshape(orig_shape)

    # Non-128-divisible total size: flatten, pad to a lane-dense multiple of 128
    # in the wrapper, copy, then slice the padding back off.
    pad = (-n) % _LANE
    xf = jnp.pad(x.reshape(-1), (0, pad))
    out2d = _copy_2d(xf.reshape(-1, _LANE))
    return out2d.reshape(-1)[:n].reshape(orig_shape)


if __name__ == "__main__":
    key = jax.random.PRNGKey(0)
    k1, k2 = jax.random.split(key)

    # Shapes consistent with TinyHAR's cross-channel-interaction input:
    # (batch, seq, sensor_channel, filter_num). Total = 2048 -> lane-dense path.
    batch, seq, sensor_channel, filter_num = 2, 8, 4, 32
    x = jax.random.normal(k1, (batch, seq, sensor_channel, filter_num), jnp.float32)

    # Default path: true identity (no kernel, no HBM traffic).
    y_fast = identity_forward(x)
    assert y_fast.shape == x.shape
    assert jnp.array_equal(y_fast, x)

    # Kernel path: materialized lane-dense copy.
    y = identity_forward(x, materialize=True)
    y = jax.block_until_ready(y)
    assert y.shape == x.shape
    assert y.dtype == x.dtype
    assert jnp.array_equal(y, x)

    # Also exercise the non-128-divisible path (pad + lane-dense copy + slice).
    x2 = jax.random.normal(k2, (3, 5, 7), jnp.float32)
    y2 = jax.block_until_ready(identity_forward(x2, materialize=True))
    assert y2.shape == x2.shape
    assert jnp.array_equal(y2, x2)

    print("KERNEL_OK")
</pallas_src>

<mosaic_0001>
module attributes {stable_mosaic.version = 11 : i64} {
  func.func @_identity_kernel(%arg0: i32, %arg1: memref<16x128xf32, #tpu.memory_space<vmem>>, %arg2: memref<16x128xf32, #tpu.memory_space<vmem>>) attributes {dimension_semantics = [#tpu.dimension_semantics<parallel>], iteration_bounds = array<i64: 1>, scalar_prefetch = 0 : i64, scratch_operands = 0 : i64, tpu.core_type = #tpu.core_type<tc>, window_params = [{transform_indices = @transform_0, window_bounds = array<i64: 16, 128>}, {transform_indices = @transform_1, window_bounds = array<i64: 16, 128>}]} {
    %c0 = arith.constant 0 : index
    %c0_0 = arith.constant 0 : index
    %0 = vector.load %arg1[%c0, %c0_0] : memref<16x128xf32, #tpu.memory_space<vmem>>, vector<16x128xf32>
    %c0_1 = arith.constant 0 : index
    %c0_2 = arith.constant 0 : index
    %1 = vector.load %arg2[%c0_1, %c0_2] : memref<16x128xf32, #tpu.memory_space<vmem>>, vector<16x128xf32>
    tpu.vector_store %arg2[%c0_1, %c0_2], %0 {strides = array<i32>} : memref<16x128xf32, #tpu.memory_space<vmem>>, vector<16x128xf32>,
    return
  }
  func.func @transform_0(%arg0: i32) -> (i32, i32) {
    %c0_i32 = arith.constant 0 : i32
    %c0_i32_0 = arith.constant 0 : i32
    return %arg0, %c0_i32 : i32, i32
  }
  func.func @transform_1(%arg0: i32) -> (i32, i32) {
    %c0_i32 = arith.constant 0 : i32
    %c0_i32_0 = arith.constant 0 : i32
    return %arg0, %c0_i32 : i32, i32
  }
}

</mosaic_0001>

<llo_original>
// kernel: tpu_custom_call.1
$region0: #{tpu_custom_call.1}
  #allocation0 [shape = 'u32[]', space=smem, size = 0x4, offset = 0x4, fixed_abs, tag = 'smem constant byte address 0x4 - core index']
  #allocation1 [shape = 'u32[72,128]{1,0:T(1,128)}', space=vmem, size = 0x9000, scoped, tag = 'internal scratch']
  %s0 = inlined_call_operand.hbm [shape: f32[16,128], index: 0, kind: input, shape index: {}, may-alias: {0,1}]
  %s1 = inlined_call_operand.hbm [shape: f32[16,128], index: 1, kind: output, shape index: {}, may-alias: {0,1}]
  %s2 = sld [smem:[#allocation0]]
  $region18: #{tpu_custom_call.1} parent=0
    _
  %s4 = ssub.s32 1, %s2
  %s5 = scalar_select 0, %s4, %s2
  $region1: #{tpu_custom_call.1} parent=0
    #allocation2 [shape = 'u8[8192]{0}', space=vmem, size = 0x2000, scoped, tag = 'input window, operand 0, single buffered']
    #allocation3 [shape = 's32[1]{0}', space=sflag, size = 0x4, scoped, tag = 'scoped memory for tpu_custom_call.1']
    #allocation4 [shape = 's32[1]{0}', space=sflag, size = 0x4, scoped, tag = 'scoped memory for tpu_custom_call.1']
    #allocation5 [shape = 'u8[8192]{0}', space=vmem, size = 0x2000, scoped, tag = 'output window, operand 0, single buffered']
    %6 = vsyncpa [#allocation3], 0
    %7 = vsyncpa [#allocation4], 0
    // Predicated region
    $region2: #{tpu_custom_call.1} parent=1 // pred_check
      _
    $region3: #{tpu_custom_call.1} parent=1 // pred_check_branch
      %9 = sbr.rel (0) target = $region5
    $region4: #{tpu_custom_call.1} parent=1 // pred_region
      %11 = vsyncadd [#allocation3], 0
      %s12 = sshll.u32 %s0, 4
      %s13 = int_to_ptr.hbm [resolvable:$true] %s12
      %s14 = sshll.u32 [#allocation2], 4
      %s15 = int_to_ptr.vmem [resolvable:$true] %s14
      %20 = dma.hbm_to_vmem [thread:$0]  %s13, 256, %s15, [#allocation3], 128, 128, 8
    $region5: #{tpu_custom_call.1} parent=1 // pred_fallthru
      _
    // Predicated region
    $region6: #{tpu_custom_call.1} parent=1 // pred_check
      _
    $region7: #{tpu_custom_call.1} parent=1 // pred_check_branch
      %22 = sbr.rel (0) target = $region9
    $region8: #{tpu_custom_call.1} parent=1 // pred_region
      %24 = dma.done [#allocation3], 256
    $region9: #{tpu_custom_call.1} parent=1 // pred_fallthru
      _
    %v25 = vld [vmem:[#allocation2] sm:$0xff]
    %v26 = vld [vmem:[#allocation2 + $0x8] sm:$0xff]
    %27 = vst [vmem:[#allocation5] sm:$0xff] %v25
    %28 = vst [vmem:[#allocation5 + $0x8] sm:$0xff] %v26
    // Predicated region
    $region10: #{tpu_custom_call.1} parent=1 // pred_check
      _
    $region11: #{tpu_custom_call.1} parent=1 // pred_check_branch
      %30 = sbr.rel (0) target = $region13
    $region12: #{tpu_custom_call.1} parent=1 // pred_region
      %32 = vsyncadd [#allocation4], 0
      %s33 = sshll.u32 [#allocation5], 4
      %s34 = int_to_ptr.vmem [resolvable:$true] %s33
      %s35 = sshll.u32 %s1, 4
      %s36 = int_to_ptr.hbm [resolvable:$true] %s35
      %41 = dma.vmem_to_hbm [thread:$0]  %s34, 256, %s36, [#allocation4], 128, 128, 8
    $region13: #{tpu_custom_call.1} parent=1 // pred_fallthru
      _
    // Predicated region
    $region14: #{tpu_custom_call.1} parent=1 // pred_check
      _
    $region15: #{tpu_custom_call.1} parent=1 // pred_check_branch
      %43 = sbr.rel (0) target = $region17
    $region16: #{tpu_custom_call.1} parent=1 // pred_region
      %45 = dma.done [#allocation4], 256
    $region17: #{tpu_custom_call.1} parent=1 // pred_fallthru
      _
    %46 = vsyncpa [#allocation3], 1
    %47 = vsyncpa [#allocation4], 1

</llo_original>
